<compile_context>
chip_gen: v7x
topology: tpu7x:2x2x1
jax: 0.10.0
libtpu: 0.0.40
codegen_flags: <defaults>
</compile_context>

<pallas_src>
import jax
import jax.numpy as jnp
from jax.experimental import pallas as pl
from jax.experimental.pallas import tpu as pltpu


def _round_up(x, m):
    return ((x + m - 1) // m) * m


def _block_diag(w, k):
    """(a, b) -> (k*a, k*b): block-diagonal with k copies of w on the diagonal."""
    a, b = w.shape
    eye = jnp.eye(k, dtype=w.dtype)
    return (eye[:, None, :, None] * w[None, :, None, :]).reshape(k * a, k * b)


def mlp_kernel(x_ref, w1_ref, b1_ref, w2_ref, b2_ref, o_ref):
    # Hidden layer on the MXU, f32 accumulate; bias + ReLU on the VPU.
    h = jnp.dot(x_ref[...], w1_ref[...], preferred_element_type=jnp.float32)
    h = jnp.maximum(h + b1_ref[...], 0.0)
    # Output layer on the MXU; bias add, sigmoid (EUP), store.
    o = jnp.dot(h, w2_ref[...], preferred_element_type=jnp.float32)
    o_ref[...] = jax.nn.sigmoid(o + b2_ref[...]).astype(o_ref.dtype)


def neuralnet_forward(x, w1, b1, w2, b2, *, tile_m=None):
    """sigmoid(relu(x @ w1 + b1) @ w2 + b2)  ==  NeuralNet.forward(x).

    x : (N, in_size) f32
    w1: (in_size, 128) f32  (transposed vs. torch nn.Linear.weight), b1: (1, 128)
    w2: (128, out_size) f32,                                          b2: (1, out_size)
    returns (N, out_size) f32
    """
    n, in_size = x.shape
    hidden = w1.shape[1]
    out_size = w2.shape[1]

    # ---- Batch folding: pack `fold` consecutive rows into one wide row. ------
    # Free reinterpretation of row-major x; weights become block-diagonal copies.
    # Keeps the folded W1 small enough to stay VMEM-resident.
    fold = 1
    for f in (4, 2):
        if (n % f == 0 and f * in_size <= 512
                and (f * in_size) * (f * hidden) * 4 <= (2 << 20)):
            fold = f
            break

    m = n // fold
    kf, hf, of = fold * in_size, fold * hidden, fold * out_size

    xf = x.reshape(m, kf)                                        # metadata-only reshape
    w1f = _block_diag(jnp.asarray(w1, jnp.float32), fold)        # (kf, hf)
    w2f = _block_diag(jnp.asarray(w2, jnp.float32), fold)        # (hf, of)
    b1f = jnp.tile(jnp.asarray(b1, jnp.float32).reshape(1, hidden), (1, fold))
    b2f = jnp.tile(jnp.asarray(b2, jnp.float32).reshape(1, out_size), (1, fold))

    # ---- Row tiling -----------------------------------------------------------
    # Only constraint on the M block is a multiple of 8 (sublane).  Aim for ~8
    # grid steps (>=4 per v7x TensorCore, good pipeline overlap on v5e/v6e) and
    # cap at 1024 folded rows so x/h/o intermediates stay a few MiB.
    if tile_m is None:
        tile_m = _round_up(pl.cdiv(m, 8), 8)
        tile_m = max(128, min(tile_m, 1024))
    tile_m = min(_round_up(max(int(tile_m), 8), 8), _round_up(m, 8))

    grid = (pl.cdiv(m, tile_m),)   # ragged tail: Pallas masks the partial block

    cost = pl.CostEstimate(
        flops=2 * m * (kf * hf + hf * of),
        transcendentals=m * of,  # sigmoid
        bytes_accessed=4 * (m * kf + kf * hf + hf * of + hf + of + m * of),
    )

    out_f = pl.pallas_call(
        mlp_kernel,
        out_shape=jax.ShapeDtypeStruct((m, of), jnp.float32),
        grid_spec=pltpu.PrefetchScalarGridSpec(
            num_scalar_prefetch=0,
            grid=grid,
            in_specs=[
                # Streamed, double-buffered row tile of (folded) x.
                pl.BlockSpec((tile_m, kf), lambda i: (i, 0)),
                # Constant index_maps => VMEM-resident across grid steps.
                pl.BlockSpec((kf, hf), lambda i: (0, 0)),   # W1 (block-diag)
                pl.BlockSpec((1, hf), lambda i: (0, 0)),    # b1 (tiled)
                pl.BlockSpec((hf, of), lambda i: (0, 0)),   # W2 (block-diag)
                pl.BlockSpec((1, of), lambda i: (0, 0)),    # b2 (tiled)
            ],
            out_specs=pl.BlockSpec((tile_m, of), lambda i: (i, 0)),
        ),
        compiler_params=pltpu.CompilerParams(
            dimension_semantics=("parallel",),
        ),
        cost_estimate=cost,
    )(xf, w1f, b1f, w2f, b2f)

    # (m, fold*out_size) is byte-identical row-major to (N, out_size).
    return out_f.reshape(n, out_size)


if __name__ == "__main__":
    IN_SIZE, HIDDEN, OUT_SIZE = 32, 128, 8

    key = jax.random.PRNGKey(0)
    kx, kw1, kb1, kw2, kb2 = jax.random.split(key, 5)

    # Deterministic init, same uniform-scale convention as torch nn.Linear.
    bound1 = 1.0 / (IN_SIZE ** 0.5)
    w1 = jax.random.uniform(kw1, (IN_SIZE, HIDDEN), jnp.float32, -bound1, bound1)
    b1 = jax.random.uniform(kb1, (1, HIDDEN), jnp.float32, -bound1, bound1)
    bound2 = 1.0 / (HIDDEN ** 0.5)
    w2 = jax.random.uniform(kw2, (HIDDEN, OUT_SIZE), jnp.float32, -bound2, bound2)
    b2 = jax.random.uniform(kb2, (1, OUT_SIZE), jnp.float32, -bound2, bound2)

    def ref(x):
        # Pure f32 reference of the torch forward.
        return jax.nn.sigmoid(jnp.maximum(x @ w1 + b1, 0.0) @ w2 + b2)

    # Case 1: N % 4 == 0 -> fold=4 path (K=128, lane-denser output).
    x1 = jax.random.normal(kx, (256, IN_SIZE), dtype=jnp.float32)
    y1 = jax.block_until_ready(neuralnet_forward(x1, w1, b1, w2, b2))
    assert y1.shape == (256, OUT_SIZE)
    assert jnp.allclose(y1, ref(x1), atol=1e-5, rtol=1e-5)

    # Case 2: ragged batch, N % 4 != 0 -> fold=2; partial row block handled by
    # Pallas masking, no wrapper-side padding.
    x2 = jax.random.normal(jax.random.fold_in(kx, 1), (202, IN_SIZE), dtype=jnp.float32)
    y2 = jax.block_until_ready(neuralnet_forward(x2, w1, b1, w2, b2))
    assert y2.shape == (202, OUT_SIZE)
    assert jnp.allclose(y2, ref(x2), atol=1e-5, rtol=1e-5)

    # Case 3: odd N -> fold=1 fallback (plain per-row kernel).
    x3 = jax.random.normal(jax.random.fold_in(kx, 2), (53, IN_SIZE), dtype=jnp.float32)
    y3 = jax.block_until_ready(neuralnet_forward(x3, w1, b1, w2, b2))
    assert y3.shape == (53, OUT_SIZE)
    assert jnp.allclose(y3, ref(x3), atol=1e-5, rtol=1e-5)

    print("KERNEL_OK")
</pallas_src>

<mosaic_0001>
module attributes {stable_mosaic.version = 11 : i64} {
  func.func @mlp_kernel(%arg0: i32, %arg1: memref<64x128xf32, #tpu.memory_space<vmem>>, %arg2: memref<128x512xf32, #tpu.memory_space<vmem>>, %arg3: memref<1x512xf32, #tpu.memory_space<vmem>>, %arg4: memref<512x32xf32, #tpu.memory_space<vmem>>, %arg5: memref<1x32xf32, #tpu.memory_space<vmem>>, %arg6: memref<64x32xf32, #tpu.memory_space<vmem>>) attributes {dimension_semantics = [#tpu.dimension_semantics<parallel>], iteration_bounds = array<i64: 1>, scalar_prefetch = 0 : i64, scratch_operands = 0 : i64, tpu.core_type = #tpu.core_type<tc>, window_params = [{transform_indices = @transform_0, window_bounds = array<i64: 64, 128>}, {pipeline_mode = #tpu.pipeline_mode<synchronous>, transform_indices = @transform_1, window_bounds = array<i64: 128, 512>}, {pipeline_mode = #tpu.pipeline_mode<synchronous>, transform_indices = @transform_2, window_bounds = array<i64: 1, 512>}, {pipeline_mode = #tpu.pipeline_mode<synchronous>, transform_indices = @transform_3, window_bounds = array<i64: 512, 32>}, {pipeline_mode = #tpu.pipeline_mode<synchronous>, transform_indices = @transform_4, window_bounds = array<i64: 1, 32>}, {transform_indices = @transform_5, window_bounds = array<i64: 64, 32>}]} {
    %c0 = arith.constant 0 : index
    %c0_0 = arith.constant 0 : index
    %0 = vector.load %arg1[%c0, %c0_0] : memref<64x128xf32, #tpu.memory_space<vmem>>, vector<64x128xf32>
    %c0_1 = arith.constant 0 : index
    %c0_2 = arith.constant 0 : index
    %1 = vector.load %arg2[%c0_1, %c0_2] : memref<128x512xf32, #tpu.memory_space<vmem>>, vector<128x512xf32>
    %cst = arith.constant dense<0.000000e+00> : vector<64x512xf32>
    %2 = tpu.matmul %0, %1, %cst {dimension_numbers = #tpu.dot_dimension_numbers<[1], [0], [0], [1], [0, 0, 1, 1], [], []>} : vector<64x128xf32>, vector<128x512xf32>, vector<64x512xf32> -> vector<64x512xf32>
    %c0_3 = arith.constant 0 : index
    %c0_4 = arith.constant 0 : index
    %3 = vector.load %arg3[%c0_3, %c0_4] : memref<1x512xf32, #tpu.memory_space<vmem>>, vector<1x512xf32>
    %4 = vector.broadcast %3 : vector<1x512xf32> to vector<64x512xf32>
    %5 = arith.addf %2, %4 : vector<64x512xf32>
    %cst_5 = arith.constant 0.000000e+00 : f32
    %6 = vector.broadcast %cst_5 : f32 to vector<64x512xf32>
    %7 = arith.maximumf %5, %6 : vector<64x512xf32>
    %c0_6 = arith.constant 0 : index
    %c0_7 = arith.constant 0 : index
    %8 = vector.load %arg4[%c0_6, %c0_7] : memref<512x32xf32, #tpu.memory_space<vmem>>, vector<512x32xf32>
    %cst_8 = arith.constant dense<0.000000e+00> : vector<64x32xf32>
    %9 = tpu.matmul %7, %8, %cst_8 {dimension_numbers = #tpu.dot_dimension_numbers<[1], [0], [0], [1], [0, 0, 1, 1], [], []>} : vector<64x512xf32>, vector<512x32xf32>, vector<64x32xf32> -> vector<64x32xf32>
    %c0_9 = arith.constant 0 : index
    %c0_10 = arith.constant 0 : index
    %10 = vector.load %arg5[%c0_9, %c0_10] : memref<1x32xf32, #tpu.memory_space<vmem>>, vector<1x32xf32>
    %11 = vector.broadcast %10 : vector<1x32xf32> to vector<64x32xf32>
    %12 = arith.addf %9, %11 : vector<64x32xf32>
    %13 = arith.negf %12 : vector<64x32xf32>
    %14 = math.exp %13 : vector<64x32xf32>
    %cst_11 = arith.constant 1.000000e+00 : f32
    %15 = vector.broadcast %cst_11 : f32 to vector<64x32xf32>
    %16 = arith.addf %15, %14 : vector<64x32xf32>
    %17 = arith.divf %15, %16 : vector<64x32xf32>
    %c0_12 = arith.constant 0 : index
    %c0_13 = arith.constant 0 : index
    %18 = vector.load %arg6[%c0_12, %c0_13] : memref<64x32xf32, #tpu.memory_space<vmem>>, vector<64x32xf32>
    tpu.vector_store %arg6[%c0_12, %c0_13], %17 {strides = array<i32>} : memref<64x32xf32, #tpu.memory_space<vmem>>, vector<64x32xf32>,
    return
  }
  func.func @transform_0(%arg0: i32) -> (i32, i32) {
    %c0_i32 = arith.constant 0 : i32
    %c0_i32_0 = arith.constant 0 : i32
    return %arg0, %c0_i32 : i32, i32
  }
  func.func @transform_1(%arg0: i32) -> (i32, i32) {
    %c0_i32 = arith.constant 0 : i32
    %c0_i32_0 = arith.constant 0 : i32
    %c0_i32_1 = arith.constant 0 : i32
    return %c0_i32, %c0_i32_0 : i32, i32
  }
  func.func @transform_2(%arg0: i32) -> (i32, i32) {
    %c0_i32 = arith.constant 0 : i32
    %c0_i32_0 = arith.constant 0 : i32
    %c0_i32_1 = arith.constant 0 : i32
    return %c0_i32, %c0_i32_0 : i32, i32
  }
  func.func @transform_3(%arg0: i32) -> (i32, i32) {
    %c0_i32 = arith.constant 0 : i32
    %c0_i32_0 = arith.constant 0 : i32
    %c0_i32_1 = arith.constant 0 : i32
    return %c0_i32, %c0_i32_0 : i32, i32
  }
  func.func @transform_4(%arg0: i32) -> (i32, i32) {
    %c0_i32 = arith.constant 0 : i32
    %c0_i32_0 = arith.constant 0 : i32
    %c0_i32_1 = arith.constant 0 : i32
    return %c0_i32, %c0_i32_0 : i32, i32
  }
  func.func @transform_5(%arg0: i32) -> (i32, i32) {
    %c0_i32 = arith.constant 0 : i32
    %c0_i32_0 = arith.constant 0 : i32
    return %arg0, %c0_i32 : i32, i32
  }
}

</mosaic_0001>

<llo_original>
// kernel: tpu_custom_call.1
$region0: #{tpu_custom_call.1}
  #allocation0 [shape = 'u32[]', space=smem, size = 0x4, offset = 0x4, fixed_abs, tag = 'smem constant byte address 0x4 - core index']
  #allocation1 [shape = 'u32[144,128]{1,0:T(1,128)}', space=vmem, size = 0x12000, scoped, tag = 'internal scratch']
  %s0 = inlined_call_operand.vmem [shape: f32[64,128], index: 0, kind: input, shape index: {}]
  %s1 = inlined_call_operand.vmem [shape: f32[128,512], index: 1, kind: input, shape index: {}]
  %s2 = inlined_call_operand.vmem [shape: f32[1,512], index: 2, kind: input, shape index: {}]
  %s3 = inlined_call_operand.vmem [shape: f32[512,32], index: 3, kind: input, shape index: {}]
  %s4 = inlined_call_operand.vmem [shape: f32[1,32], index: 4, kind: input, shape index: {}]
  %s5 = inlined_call_operand.vmem [shape: f32[64,32], index: 5, kind: output, shape index: {}]
  %s6 = sld [smem:[#allocation0]]
  $region30: #{tpu_custom_call.1} parent=0
    _
  %s8 = ssub.s32 1, %s6
  %s9 = scalar_select 0, %s8, %s6
  // Predicated region
  $region2: #{tpu_custom_call.1} parent=0 // pred_check
    _
  $region3: #{tpu_custom_call.1} parent=0 // pred_check_branch
    %11 = sbr.rel (0) target = $region5
  $region4: #{tpu_custom_call.1} parent=0 // pred_region
    _
  $region5: #{tpu_custom_call.1} parent=0 // pred_fallthru
    _
  // Predicated region
  $region6: #{tpu_custom_call.1} parent=0 // pred_check
    _
  $region7: #{tpu_custom_call.1} parent=0 // pred_check_branch
    %13 = sbr.rel (0) target = $region9
  $region8: #{tpu_custom_call.1} parent=0 // pred_region
    _
  $region9: #{tpu_custom_call.1} parent=0 // pred_fallthru
    _
  // Predicated region
  $region10: #{tpu_custom_call.1} parent=0 // pred_check
    _
  $region11: #{tpu_custom_call.1} parent=0 // pred_check_branch
    %15 = sbr.rel (0) target = $region13
  $region12: #{tpu_custom_call.1} parent=0 // pred_region
    _
  $region13: #{tpu_custom_call.1} parent=0 // pred_fallthru
    _
  // Predicated region
  $region14: #{tpu_custom_call.1} parent=0 // pred_check
    _
  $region15: #{tpu_custom_call.1} parent=0 // pred_check_branch
    %17 = sbr.rel (0) target = $region17
  $region16: #{tpu_custom_call.1} parent=0 // pred_region
    _
  $region17: #{tpu_custom_call.1} parent=0 // pred_fallthru
    _
  // Predicated region
  $region18: #{tpu_custom_call.1} parent=0 // pred_check
    _
  $region19: #{tpu_custom_call.1} parent=0 // pred_check_branch
    %19 = sbr.rel (0) target = $region21
  $region20: #{tpu_custom_call.1} parent=0 // pred_region
    _
  $region21: #{tpu_custom_call.1} parent=0 // pred_fallthru
    _
  %v20 = vld [vmem:[%s0] sm:$0xff]
  %v21 = vld [vmem:[%s0 + $0x8] sm:$0xff]
  %v22 = vld [vmem:[%s0 + $0x10] sm:$0xff]
  %v23 = vld [vmem:[%s0 + $0x18] sm:$0xff]
  %v24 = vld [vmem:[%s0 + $0x20] sm:$0xff]
  %v25 = vld [vmem:[%s0 + $0x28] sm:$0xff]
  %v26 = vld [vmem:[%s0 + $0x30] sm:$0xff]
  %v27 = vld [vmem:[%s0 + $0x38] sm:$0xff]
  %v28 = vld [vmem:[%s1] sm:$0xff]
  %v29 = vld [vmem:[%s1 + $0x8] sm:$0xff]
  %v30 = vld [vmem:[%s1 + $0x10] sm:$0xff]
  %v31 = vld [vmem:[%s1 + $0x18] sm:$0xff]
  %v32 = vld [vmem:[%s1 + $0x20] sm:$0xff]
  %v33 = vld [vmem:[%s1 + $0x28] sm:$0xff]
  %v34 = vld [vmem:[%s1 + $0x30] sm:$0xff]
  %v35 = vld [vmem:[%s1 + $0x38] sm:$0xff]
  %v36 = vld [vmem:[%s1 + $0x40] sm:$0xff]
  %v37 = vld [vmem:[%s1 + $0x48] sm:$0xff]
  %v38 = vld [vmem:[%s1 + $0x50] sm:$0xff]
  %v39 = vld [vmem:[%s1 + $0x58] sm:$0xff]
  %v40 = vld [vmem:[%s1 + $0x60] sm:$0xff]
  %v41 = vld [vmem:[%s1 + $0x68] sm:$0xff]
  %v42 = vld [vmem:[%s1 + $0x70] sm:$0xff]
  %v43 = vld [vmem:[%s1 + $0x78] sm:$0xff]
  %v44 = vld [vmem:[%s1 + $0x80] sm:$0xff]
  %v45 = vld [vmem:[%s1 + $0x88] sm:$0xff]
  %v46 = vld [vmem:[%s1 + $0x90] sm:$0xff]
  %v47 = vld [vmem:[%s1 + $0x98] sm:$0xff]
  %v48 = vld [vmem:[%s1 + $0xa0] sm:$0xff]
  %v49 = vld [vmem:[%s1 + $0xa8] sm:$0xff]
  %v50 = vld [vmem:[%s1 + $0xb0] sm:$0xff]
  %v51 = vld [vmem:[%s1 + $0xb8] sm:$0xff]
  %v52 = vld [vmem:[%s1 + $0xc0] sm:$0xff]
  %v53 = vld [vmem:[%s1 + $0xc8] sm:$0xff]
  %v54 = vld [vmem:[%s1 + $0xd0] sm:$0xff]
  %v55 = vld [vmem:[%s1 + $0xd8] sm:$0xff]
  %v56 = vld [vmem:[%s1 + $0xe0] sm:$0xff]
  %v57 = vld [vmem:[%s1 + $0xe8] sm:$0xff]
  %v58 = vld [vmem:[%s1 + $0xf0] sm:$0xff]
  %v59 = vld [vmem:[%s1 + $0xf8] sm:$0xff]
  %v60 = vld [vmem:[%s1 + $0x100] sm:$0xff]
  %v61 = vld [vmem:[%s1 + $0x108] sm:$0xff]
  %v62 = vld [vmem:[%s1 + $0x110] sm:$0xff]
  %v63 = vld [vmem:[%s1 + $0x118] sm:$0xff]
  %v64 = vld [vmem:[%s1 + $0x120] sm:$0xff]
  %v65 = vld [vmem:[%s1 + $0x128] sm:$0xff]
  %v66 = vld [vmem:[%s1 + $0x130] sm:$0xff]
  %v67 = vld [vmem:[%s1 + $0x138] sm:$0xff]
  %v68 = vld [vmem:[%s1 + $0x140] sm:$0xff]
  %v69 = vld [vmem:[%s1 + $0x148] sm:$0xff]
  %v70 = vld [vmem:[%s1 + $0x150] sm:$0xff]
  %v71 = vld [vmem:[%s1 + $0x158] sm:$0xff]
  %v72 = vld [vmem:[%s1 + $0x160] sm:$0xff]
  %v73 = vld [vmem:[%s1 + $0x168] sm:$0xff]
  %v74 = vld [vmem:[%s1 + $0x170] sm:$0xff]
  %v75 = vld [vmem:[%s1 + $0x178] sm:$0xff]
  %v76 = vld [vmem:[%s1 + $0x180] sm:$0xff]
  %v77 = vld [vmem:[%s1 + $0x188] sm:$0xff]
  %v78 = vld [vmem:[%s1 + $0x190] sm:$0xff]
  %v79 = vld [vmem:[%s1 + $0x198] sm:$0xff]
  %v80 = vld [vmem:[%s1 + $0x1a0] sm:$0xff]
  %v81 = vld [vmem:[%s1 + $0x1a8] sm:$0xff]
  %v82 = vld [vmem:[%s1 + $0x1b0] sm:$0xff]
  %v83 = vld [vmem:[%s1 + $0x1b8] sm:$0xff]
  %v84 = vld [vmem:[%s1 + $0x1c0] sm:$0xff]
  %v85 = vld [vmem:[%s1 + $0x1c8] sm:$0xff]
  %v86 = vld [vmem:[%s1 + $0x1d0] sm:$0xff]
  %v87 = vld [vmem:[%s1 + $0x1d8] sm:$0xff]
  %v88 = vld [vmem:[%s1 + $0x1e0] sm:$0xff]
  %v89 = vld [vmem:[%s1 + $0x1e8] sm:$0xff]
  %v90 = vld [vmem:[%s1 + $0x1f0] sm:$0xff]
  %v91 = vld [vmem:[%s1 + $0x1f8] sm:$0xff]
  %v92 = vld [vmem:[%s2] sm:$0xf]
  %v94 = vlaneseq
  %v95 = vshrl.u32 %v94, 7
  %v96 = vsub.s32 0, %v95
  %v97 = vrot.slane %v92, %v96
  %v98 = vlaneseq
  %v99 = vshrl.u32 %v98, 7
  %v100 = vsub.s32 1, %v99
  %v101 = vrot.slane %v92, %v100
  %v102 = vlaneseq
  %v103 = vshrl.u32 %v102, 7
  %v104 = vsub.s32 2, %v103
  %v105 = vrot.slane %v92, %v104
  %v106 = vlaneseq
  %v107 = vshrl.u32 %v106, 7
  %v108 = vsub.s32 3, %v107
  %v109 = vrot.slane %v92, %v108
  %114 = vmatprep.subr.mxu0 %v29
  %115 = vmatpush1.msra.mxu0 %v28
  %116 = vmatprep.subr.mxu0 %v33
  %117 = vmatpush1.msra.mxu0 %v32
  %118 = vmatprep.subr.mxu0 %v37
  %119 = vmatpush1.msra.mxu0 %v36
  %120 = vmatprep.subr.mxu0 %v41
  %121 = vmatpush1.msra.mxu0 %v40
  %122 = vmatprep.subr.mxu0 %v45
  %123 = vmatpush1.msra.mxu0 %v44
  %124 = vmatprep.subr.mxu0 %v49
  %125 = vmatpush1.msra.mxu0 %v48
  %126 = vmatprep.subr.mxu0 %v53
  %127 = vmatpush1.msra.mxu0 %v52
  %128 = vmatprep.subr.mxu0 %v57
  %129 = vmatpush1.msra.mxu0 %v56
  %130 = vmatprep.subr.mxu0 %v61
  %131 = vmatpush1.msra.mxu0 %v60
  %132 = vmatprep.subr.mxu0 %v65
  %133 = vmatpush1.msra.mxu0 %v64
  %134 = vmatprep.subr.mxu0 %v69
  %135 = vmatpush1.msra.mxu0 %v68
  %136 = vmatprep.subr.mxu0 %v73
  %137 = vmatpush1.msra.mxu0 %v72
  %138 = vmatprep.subr.mxu0 %v77
  %139 = vmatpush1.msra.mxu0 %v76
  %140 = vmatprep.subr.mxu0 %v81
  %141 = vmatpush1.msra.mxu0 %v80
  %142 = vmatprep.subr.mxu0 %v85
  %143 = vmatpush1.msra.mxu0 %v84
  %144 = vmatprep.subr.mxu0 %v89
  %145 = vmatpush1.msra.mxu0 %v88
  %146 = vmatprep.subr.mxu0 0.0
  %147 = vmatpush1.msra.mxu0 0.0
  %148 = vmatprep.subr.mxu0 0.0
  %149 = vmatpush1.msra.mxu0 0.0
  %150 = vmatprep.subr.mxu0 0.0
  %151 = vmatpush1.msra.mxu0 0.0
  %152 = vmatprep.subr.mxu0 0.0
  %153 = vmatpush1.msra.mxu0 0.0
  %154 = vmatprep.subr.mxu0 0.0
  %155 = vmatpush1.msra.mxu0 0.0
  %156 = vmatprep.subr.mxu0 0.0
  %157 = vmatpush1.msra.mxu0 0.0
  %158 = vmatprep.subr.mxu0 0.0
  %159 = vmatpush1.msra.mxu0 0.0
  %160 = vmatprep.subr.mxu0 0.0
  %161 = vmatpush1.msra.mxu0 0.0
  %162 = vmatprep.subr.mxu0 0.0
  %163 = vmatpush1.msra.mxu0 0.0
  %164 = vmatprep.subr.mxu0 0.0
  %165 = vmatpush1.msra.mxu0 0.0
  %166 = vmatprep.subr.mxu0 0.0
  %167 = vmatpush1.msra.mxu0 0.0
  %168 = vmatprep.subr.mxu0 0.0
  %169 = vmatpush1.msra.mxu0 0.0
  %170 = vmatprep.subr.mxu0 0.0
  %171 = vmatpush1.msra.mxu0 0.0
  %172 = vmatprep.subr.mxu0 0.0
  %173 = vmatpush1.msra.mxu0 0.0
  %174 = vmatprep.subr.mxu0 0.0
  %175 = vmatpush1.msra.mxu0 0.0
  %176 = vmatprep.subr.mxu0 0.0
  %177 = vmatpush1.msra.mxu0 0.0
  %178 = vmatprep.mubr.f32.mxu0 0.0
  %179 = vmatmul.mubr.f32.gmra.mrb[0].mxu0 %v20
  %v180 = vpop.f32.mrb[0].mxu0
  %v181 = vadd.f32 %v97, %v180
  %v182 = vpop.f32.mrb[0].mxu0
  %v183 = vadd.f32 %v101, %v182
  %184 = vmatprep.mubr.f32.mxu0 0.0
  %185 = vmatmul.mubr.f32.gmra.mrb[0].mxu0 %v21
  %v186 = vpop.f32.mrb[0].mxu0
  %v187 = vadd.f32 %v97, %v186
  %v188 = vpop.f32.mrb[0].mxu0
  %v189 = vadd.f32 %v101, %v188
  %190 = vmatprep.mubr.f32.mxu0 0.0
  %191 = vmatmul.mubr.f32.gmra.mrb[0].mxu0 %v22
  %v192 = vpop.f32.mrb[0].mxu0
  %v193 = vadd.f32 %v97, %v192
  %v194 = vpop.f32.mrb[0].mxu0
  %v195 = vadd.f32 %v101, %v194
  %196 = vmatprep.mubr.f32.mxu0 0.0
  %197 = vmatmul.mubr.f32.gmra.mrb[0].mxu0 %v23
  %v198 = vpop.f32.mrb[0].mxu0
  %v199 = vadd.f32 %v97, %v198
  %v200 = vpop.f32.mrb[0].mxu0
  %v201 = vadd.f32 %v101, %v200
  %202 = vmatprep.mubr.f32.mxu0 0.0
  %203 = vmatmul.mubr.f32.gmra.mrb[0].mxu0 %v24
  %v204 = vpop.f32.mrb[0].mxu0
  %v205 = vadd.f32 %v97, %v204
  %v206 = vpop.f32.mrb[0].mxu0
  %v207 = vadd.f32 %v101, %v206
  %208 = vmatprep.mubr.f32.mxu0 0.0
  %209 = vmatmul.mubr.f32.gmra.mrb[0].mxu0 %v25
  %v210 = vpop.f32.mrb[0].mxu0
  %v211 = vadd.f32 %v97, %v210
  %v212 = vpop.f32.mrb[0].mxu0
  %v213 = vadd.f32 %v101, %v212
  %214 = vmatprep.mubr.f32.mxu0 0.0
  %215 = vmatmul.mubr.f32.gmra.mrb[0].mxu0 %v26
  %v216 = vpop.f32.mrb[0].mxu0
  %v217 = vadd.f32 %v97, %v216
  %v218 = vpop.f32.mrb[0].mxu0
  %v219 = vadd.f32 %v101, %v218
  %220 = vmatprep.mubr.f32.mxu0 0.0
  %221 = vmatmul.mubr.f32.gmra.mrb[0].mxu0 %v27
  %v222 = vpop.f32.mrb[0].mxu0
  %v223 = vadd.f32 %v97, %v222
  %v224 = vpop.f32.mrb[0].mxu0
  %v225 = vadd.f32 %v101, %v224
  %226 = vdwg.mxu0
  %227 = vmatprep.subr.mxu0 %v31
  %228 = vmatpush1.msra.mxu0 %v30
  %229 = vmatprep.subr.mxu0 %v35
  %230 = vmatpush1.msra.mxu0 %v34
  %231 = vmatprep.subr.mxu0 %v39
  %232 = vmatpush1.msra.mxu0 %v38
  %233 = vmatprep.subr.mxu0 %v43
  %234 = vmatpush1.msra.mxu0 %v42
  %235 = vmatprep.subr.mxu0 %v47
  %236 = vmatpush1.msra.mxu0 %v46
  %237 = vmatprep.subr.mxu0 %v51
  %238 = vmatpush1.msra.mxu0 %v50
  %239 = vmatprep.subr.mxu0 %v55
  %240 = vmatpush1.msra.mxu0 %v54
  %241 = vmatprep.subr.mxu0 %v59
  %242 = vmatpush1.msra.mxu0 %v58
  %243 = vmatprep.subr.mxu0 %v63
  %244 = vmatpush1.msra.mxu0 %v62
  %245 = vmatprep.subr.mxu0 %v67
  %246 = vmatpush1.msra.mxu0 %v66
  %247 = vmatprep.subr.mxu0 %v71
  %248 = vmatpush1.msra.mxu0 %v70
  %249 = vmatprep.subr.mxu0 %v75
  %250 = vmatpush1.msra.mxu0 %v74
  %251 = vmatprep.subr.mxu0 %v79
  %252 = vmatpush1.msra.mxu0 %v78
  %253 = vmatprep.subr.mxu0 %v83
  %254 = vmatpush1.msra.mxu0 %v82
  %255 = vmatprep.subr.mxu0 %v87
  %256 = vmatpush1.msra.mxu0 %v86
  %257 = vmatprep.subr.mxu0 %v91
  %258 = vmatpush1.msra.mxu0 %v90
  %259 = vmatprep.subr.mxu0 0.0
  %260 = vmatpush1.msra.mxu0 0.0
  %261 = vmatprep.subr.mxu0 0.0
  %262 = vmatpush1.msra.mxu0 0.0
  %263 = vmatprep.subr.mxu0 0.0
  %264 = vmatpush1.msra.mxu0 0.0
  %265 = vmatprep.subr.mxu0 0.0
  %266 = vmatpush1.msra.mxu0 0.0
  %267 = vmatprep.subr.mxu0 0.0
  %268 = vmatpush1.msra.mxu0 0.0
  %269 = vmatprep.subr.mxu0 0.0
  %270 = vmatpush1.msra.mxu0 0.0
  %271 = vmatprep.subr.mxu0 0.0
  %272 = vmatpush1.msra.mxu0 0.0
  %273 = vmatprep.subr.mxu0 0.0
  %274 = vmatpush1.msra.mxu0 0.0
  %275 = vmatprep.subr.mxu0 0.0
  %276 = vmatpush1.msra.mxu0 0.0
  %277 = vmatprep.subr.mxu0 0.0
  %278 = vmatpush1.msra.mxu0 0.0
  %279 = vmatprep.subr.mxu0 0.0
  %280 = vmatpush1.msra.mxu0 0.0
  %281 = vmatprep.subr.mxu0 0.0
  %282 = vmatpush1.msra.mxu0 0.0
  %283 = vmatprep.subr.mxu0 0.0
  %284 = vmatpush1.msra.mxu0 0.0
  %285 = vmatprep.subr.mxu0 0.0
  %286 = vmatpush1.msra.mxu0 0.0
  %287 = vmatprep.subr.mxu0 0.0
  %288 = vmatpush1.msra.mxu0 0.0
  %289 = vmatprep.subr.mxu0 0.0
  %290 = vmatpush1.msra.mxu0 0.0
  %291 = vmatprep.mubr.f32.mxu0 0.0
  %292 = vmatmul.mubr.f32.gmra.mrb[0].mxu0 %v20
  %v293 = vpop.f32.mrb[0].mxu0
  %v294 = vadd.f32 %v105, %v293
  %v295 = vpop.f32.mrb[0].mxu0
  %v296 = vadd.f32 %v109, %v295
  %297 = vmatprep.mubr.f32.mxu0 0.0
  %298 = vmatmul.mubr.f32.gmra.mrb[0].mxu0 %v21
  %v299 = vpop.f32.mrb[0].mxu0
  %v300 = vadd.f32 %v105, %v299
  %v301 = vpop.f32.mrb[0].mxu0
  %v302 = vadd.f32 %v109, %v301
  %303 = vmatprep.mubr.f32.mxu0 0.0
  %304 = vmatmul.mubr.f32.gmra.mrb[0].mxu0 %v22
  %v305 = vpop.f32.mrb[0].mxu0
  %v306 = vadd.f32 %v105, %v305
  %v307 = vpop.f32.mrb[0].mxu0
  %v308 = vadd.f32 %v109, %v307
  %309 = vmatprep.mubr.f32.mxu0 0.0
  %310 = vmatmul.mubr.f32.gmra.mrb[0].mxu0 %v23
  %v311 = vpop.f32.mrb[0].mxu0
  %v312 = vadd.f32 %v105, %v311
  %v313 = vpop.f32.mrb[0].mxu0
  %v314 = vadd.f32 %v109, %v313
  %315 = vmatprep.mubr.f32.mxu0 0.0
  %316 = vmatmul.mubr.f32.gmra.mrb[0].mxu0 %v24
  %v317 = vpop.f32.mrb[0].mxu0
  %v318 = vadd.f32 %v105, %v317
  %v319 = vpop.f32.mrb[0].mxu0
  %v320 = vadd.f32 %v109, %v319
  %321 = vmatprep.mubr.f32.mxu0 0.0
  %322 = vmatmul.mubr.f32.gmra.mrb[0].mxu0 %v25
  %v323 = vpop.f32.mrb[0].mxu0
  %v324 = vadd.f32 %v105, %v323
  %v325 = vpop.f32.mrb[0].mxu0
  %v326 = vadd.f32 %v109, %v325
  %327 = vmatprep.mubr.f32.mxu0 0.0
  %328 = vmatmul.mubr.f32.gmra.mrb[0].mxu0 %v26
  %v329 = vpop.f32.mrb[0].mxu0
  %v330 = vadd.f32 %v105, %v329
  %v331 = vpop.f32.mrb[0].mxu0
  %v332 = vadd.f32 %v109, %v331
  %333 = vmatprep.mubr.f32.mxu0 0.0
  %334 = vmatmul.mubr.f32.gmra.mrb[0].mxu0 %v27
  %v335 = vpop.f32.mrb[0].mxu0
  %v336 = vadd.f32 %v105, %v335
  %v337 = vpop.f32.mrb[0].mxu0
  %v338 = vadd.f32 %v109, %v337
  %339 = vdwg.mxu0
  %v340 = vmax.f32 %v181, 0.0
  %v341 = vmax.f32 %v183, 0.0
  %v342 = vmax.f32 %v294, 0.0
  %v343 = vmax.f32 %v296, 0.0
  %v344 = vmax.f32 %v187, 0.0
  %v345 = vmax.f32 %v189, 0.0
  %v346 = vmax.f32 %v300, 0.0
  %v347 = vmax.f32 %v302, 0.0
  %v348 = vmax.f32 %v193, 0.0
  %v349 = vmax.f32 %v195, 0.0
  %v350 = vmax.f32 %v306, 0.0
  %v351 = vmax.f32 %v308, 0.0
  %v352 = vmax.f32 %v199, 0.0
  %v353 = vmax.f32 %v201, 0.0
  %v354 = vmax.f32 %v312, 0.0
  %v355 = vmax.f32 %v314, 0.0
  %v356 = vmax.f32 %v205, 0.0
  %v357 = vmax.f32 %v207, 0.0
  %v358 = vmax.f32 %v318, 0.0
  %v359 = vmax.f32 %v320, 0.0
  %v360 = vmax.f32 %v211, 0.0
  %v361 = vmax.f32 %v213, 0.0
  %v362 = vmax.f32 %v324, 0.0
  %v363 = vmax.f32 %v326, 0.0
  %v364 = vmax.f32 %v217, 0.0
  %v365 = vmax.f32 %v219, 0.0
  %v366 = vmax.f32 %v330, 0.0
  %v367 = vmax.f32 %v332, 0.0
  %v368 = vmax.f32 %v223, 0.0
  %v369 = vmax.f32 %v225, 0.0
  %v370 = vmax.f32 %v336, 0.0
  %v371 = vmax.f32 %v338, 0.0
  %v372 = vld [vmem:[%s3] sm:$0xff]
  %v373 = vld [vmem:[%s3 + $0x8] sm:$0xff]
  %v374 = vld [vmem:[%s3 + $0x10] sm:$0xff]
  %v375 = vld [vmem:[%s3 + $0x18] sm:$0xff]
  %v376 = vld [vmem:[%s3 + $0x20] sm:$0xff]
  %v377 = vld [vmem:[%s3 + $0x28] sm:$0xff]
  %v378 = vld [vmem:[%s3 + $0x30] sm:$0xff]
  %v379 = vld [vmem:[%s3 + $0x38] sm:$0xff]
  %v380 = vld [vmem:[%s3 + $0x40] sm:$0xff]
  %v381 = vld [vmem:[%s3 + $0x48] sm:$0xff]
  %v382 = vld [vmem:[%s3 + $0x50] sm:$0xff]
  %v383 = vld [vmem:[%s3 + $0x58] sm:$0xff]
  %v384 = vld [vmem:[%s3 + $0x60] sm:$0xff]
  %v385 = vld [vmem:[%s3 + $0x68] sm:$0xff]
  %v386 = vld [vmem:[%s3 + $0x70] sm:$0xff]
  %v387 = vld [vmem:[%s3 + $0x78] sm:$0xff]
  %v388 = vld [vmem:[%s3 + $0x80] sm:$0xff]
  %v389 = vld [vmem:[%s3 + $0x88] sm:$0xff]
  %v390 = vld [vmem:[%s3 + $0x90] sm:$0xff]
  %v391 = vld [vmem:[%s3 + $0x98] sm:$0xff]
  %v392 = vld [vmem:[%s3 + $0xa0] sm:$0xff]
  %v393 = vld [vmem:[%s3 + $0xa8] sm:$0xff]
  %v394 = vld [vmem:[%s3 + $0xb0] sm:$0xff]
  %v395 = vld [vmem:[%s3 + $0xb8] sm:$0xff]
  %v396 = vld [vmem:[%s3 + $0xc0] sm:$0xff]
  %v397 = vld [vmem:[%s3 + $0xc8] sm:$0xff]
  %v398 = vld [vmem:[%s3 + $0xd0] sm:$0xff]
  %v399 = vld [vmem:[%s3 + $0xd8] sm:$0xff]
  %v400 = vld [vmem:[%s3 + $0xe0] sm:$0xff]
  %v401 = vld [vmem:[%s3 + $0xe8] sm:$0xff]
  %v402 = vld [vmem:[%s3 + $0xf0] sm:$0xff]
  %v403 = vld [vmem:[%s3 + $0xf8] sm:$0xff]
  %v404 = vld [vmem:[%s3 + $0x100] sm:$0xff]
  %v405 = vld [vmem:[%s3 + $0x108] sm:$0xff]
  %v406 = vld [vmem:[%s3 + $0x110] sm:$0xff]
  %v407 = vld [vmem:[%s3 + $0x118] sm:$0xff]
  %v408 = vld [vmem:[%s3 + $0x120] sm:$0xff]
  %v409 = vld [vmem:[%s3 + $0x128] sm:$0xff]
  %v410 = vld [vmem:[%s3 + $0x130] sm:$0xff]
  %v411 = vld [vmem:[%s3 + $0x138] sm:$0xff]
  %v412 = vld [vmem:[%s3 + $0x140] sm:$0xff]
  %v413 = vld [vmem:[%s3 + $0x148] sm:$0xff]
  %v414 = vld [vmem:[%s3 + $0x150] sm:$0xff]
  %v415 = vld [vmem:[%s3 + $0x158] sm:$0xff]
  %v416 = vld [vmem:[%s3 + $0x160] sm:$0xff]
  %v417 = vld [vmem:[%s3 + $0x168] sm:$0xff]
  %v418 = vld [vmem:[%s3 + $0x170] sm:$0xff]
  %v419 = vld [vmem:[%s3 + $0x178] sm:$0xff]
  %v420 = vld [vmem:[%s3 + $0x180] sm:$0xff]
  %v421 = vld [vmem:[%s3 + $0x188] sm:$0xff]
  %v422 = vld [vmem:[%s3 + $0x190] sm:$0xff]
  %v423 = vld [vmem:[%s3 + $0x198] sm:$0xff]
  %v424 = vld [vmem:[%s3 + $0x1a0] sm:$0xff]
  %v425 = vld [vmem:[%s3 + $0x1a8] sm:$0xff]
  %v426 = vld [vmem:[%s3 + $0x1b0] sm:$0xff]
  %v427 = vld [vmem:[%s3 + $0x1b8] sm:$0xff]
  %v428 = vld [vmem:[%s3 + $0x1c0] sm:$0xff]
  %v429 = vld [vmem:[%s3 + $0x1c8] sm:$0xff]
  %v430 = vld [vmem:[%s3 + $0x1d0] sm:$0xff]
  %v431 = vld [vmem:[%s3 + $0x1d8] sm:$0xff]
  %v432 = vld [vmem:[%s3 + $0x1e0] sm:$0xff]
  %v433 = vld [vmem:[%s3 + $0x1e8] sm:$0xff]
  %v434 = vld [vmem:[%s3 + $0x1f0] sm:$0xff]
  %v435 = vld [vmem:[%s3 + $0x1f8] sm:$0xff]
  %v436 = vld [vmem:[%s4] sm:$0x1]
  %v438 = vlaneseq
  %v439 = vshrl.u32 %v438, 7
  %v440 = vsub.s32 0, %v439
  %v441 = vrot.slane %v436, %v440
  %443 = vmatprep.subr.mxu0 0.0
  %444 = vmatpush1.msra.mxu0 %v372
  %445 = vmatprep.subr.mxu0 0.0
  %446 = vmatpush1.msra.mxu0 %v373
  %447 = vmatprep.subr.mxu0 0.0
  %448 = vmatpush1.msra.mxu0 %v374
  %449 = vmatprep.subr.mxu0 0.0
  %450 = vmatpush1.msra.mxu0 %v375
  %451 = vmatprep.subr.mxu0 0.0
  %452 = vmatpush1.msra.mxu0 %v376
  %453 = vmatprep.subr.mxu0 0.0
  %454 = vmatpush1.msra.mxu0 %v377
  %455 = vmatprep.subr.mxu0 0.0
  %456 = vmatpush1.msra.mxu0 %v378
  %457 = vmatprep.subr.mxu0 0.0
  %458 = vmatpush1.msra.mxu0 %v379
  %459 = vmatprep.subr.mxu0 0.0
  %460 = vmatpush1.msra.mxu0 %v380
  %461 = vmatprep.subr.mxu0 0.0
  %462 = vmatpush1.msra.mxu0 %v381
  %463 = vmatprep.subr.mxu0 0.0
  %464 = vmatpush1.msra.mxu0 %v382
  %465 = vmatprep.subr.mxu0 0.0
  %466 = vmatpush1.msra.mxu0 %v383
  %467 = vmatprep.subr.mxu0 0.0
  %468 = vmatpush1.msra.mxu0 %v384
  %469 = vmatprep.subr.mxu0 0.0
  %470 = vmatpush1.msra.mxu0 %v385
  %471 = vmatprep.subr.mxu0 0.0
  %472 = vmatpush1.msra.mxu0 %v386
  %473 = vmatprep.subr.mxu0 0.0
  %474 = vmatpush1.msra.mxu0 %v387
  %475 = vmatprep.subr.mxu0 0.0
  %476 = vmatpush1.msra.mxu0 %v388
  %477 = vmatprep.subr.mxu0 0.0
  %478 = vmatpush1.msra.mxu0 %v389
  %479 = vmatprep.subr.mxu0 0.0
  %480 = vmatpush1.msra.mxu0 %v390
  %481 = vmatprep.subr.mxu0 0.0
  %482 = vmatpush1.msra.mxu0 %v391
  %483 = vmatprep.subr.mxu0 0.0
  %484 = vmatpush1.msra.mxu0 %v392
  %485 = vmatprep.subr.mxu0 0.0
  %486 = vmatpush1.msra.mxu0 %v393
  %487 = vmatprep.subr.mxu0 0.0
  %488 = vmatpush1.msra.mxu0 %v394
  %489 = vmatprep.subr.mxu0 0.0
  %490 = vmatpush1.msra.mxu0 %v395
  %491 = vmatprep.subr.mxu0 0.0
  %492 = vmatpush1.msra.mxu0 %v396
  %493 = vmatprep.subr.mxu0 0.0
  %494 = vmatpush1.msra.mxu0 %v397
  %495 = vmatprep.subr.mxu0 0.0
  %496 = vmatpush1.msra.mxu0 %v398
  %497 = vmatprep.subr.mxu0 0.0
  %498 = vmatpush1.msra.mxu0 %v399
  %499 = vmatprep.subr.mxu0 0.0
  %500 = vmatpush1.msra.mxu0 %v400
  %501 = vmatprep.subr.mxu0 0.0
  %502 = vmatpush1.msra.mxu0 %v401
  %503 = vmatprep.subr.mxu0 0.0
  %504 = vmatpush1.msra.mxu0 %v402
  %505 = vmatprep.subr.mxu0 0.0
  %506 = vmatpush1.msra.mxu0 %v403
  %507 = vmatprep.mubr.f32.mxu0 %v341
  %508 = vmatmul.mubr.f32.gmra.mrb[0].mxu0 %v340
  %v509 = vpop.f32.mrb[0].mxu0
  %v510 = vadd.f32 %v441, %v509
  %v511 = vpop.f32.mrb[0].mxu0
  %512 = vmatprep.mubr.f32.mxu0 %v345
  %513 = vmatmul.mubr.f32.gmra.mrb[0].mxu0 %v344
  %v514 = vpop.f32.mrb[0].mxu0
  %v515 = vadd.f32 %v441, %v514
  %v516 = vpop.f32.mrb[0].mxu0
  %517 = vmatprep.mubr.f32.mxu0 %v349
  %518 = vmatmul.mubr.f32.gmra.mrb[0].mxu0 %v348
  %v519 = vpop.f32.mrb[0].mxu0
  %v520 = vadd.f32 %v441, %v519
  %v521 = vpop.f32.mrb[0].mxu0
  %522 = vmatprep.mubr.f32.mxu0 %v353
  %523 = vmatmul.mubr.f32.gmra.mrb[0].mxu0 %v352
  %v524 = vpop.f32.mrb[0].mxu0
  %v525 = vadd.f32 %v441, %v524
  %v526 = vpop.f32.mrb[0].mxu0
  %527 = vmatprep.mubr.f32.mxu0 %v357
  %528 = vmatmul.mubr.f32.gmra.mrb[0].mxu0 %v356
  %v529 = vpop.f32.mrb[0].mxu0
  %v530 = vadd.f32 %v441, %v529
  %v531 = vpop.f32.mrb[0].mxu0
  %532 = vmatprep.mubr.f32.mxu0 %v361
  %533 = vmatmul.mubr.f32.gmra.mrb[0].mxu0 %v360
  %v534 = vpop.f32.mrb[0].mxu0
  %v535 = vadd.f32 %v441, %v534
  %v536 = vpop.f32.mrb[0].mxu0
  %537 = vmatprep.mubr.f32.mxu0 %v365
  %538 = vmatmul.mubr.f32.gmra.mrb[0].mxu0 %v364
  %v539 = vpop.f32.mrb[0].mxu0
  %v540 = vadd.f32 %v441, %v539
  %v541 = vpop.f32.mrb[0].mxu0
  %542 = vmatprep.mubr.f32.mxu0 %v369
  %543 = vmatmul.mubr.f32.gmra.mrb[0].mxu0 %v368
  %v544 = vpop.f32.mrb[0].mxu0
  %v545 = vadd.f32 %v441, %v544
  %v546 = vpop.f32.mrb[0].mxu0
  %547 = vdwg.mxu0
  %548 = vmatprep.subr.mxu0 0.0
  %549 = vmatpush1.msra.mxu0 %v404
  %550 = vmatprep.subr.mxu0 0.0
  %551 = vmatpush1.msra.mxu0 %v405
  %552 = vmatprep.subr.mxu0 0.0
  %553 = vmatpush1.msra.mxu0 %v406
  %554 = vmatprep.subr.mxu0 0.0
  %555 = vmatpush1.msra.mxu0 %v407
  %556 = vmatprep.subr.mxu0 0.0
  %557 = vmatpush1.msra.mxu0 %v408
  %558 = vmatprep.subr.mxu0 0.0
  %559 = vmatpush1.msra.mxu0 %v409
  %560 = vmatprep.subr.mxu0 0.0
  %561 = vmatpush1.msra.mxu0 %v410
  %562 = vmatprep.subr.mxu0 0.0
  %563 = vmatpush1.msra.mxu0 %v411
  %564 = vmatprep.subr.mxu0 0.0
  %565 = vmatpush1.msra.mxu0 %v412
  %566 = vmatprep.subr.mxu0 0.0
  %567 = vmatpush1.msra.mxu0 %v413
  %568 = vmatprep.subr.mxu0 0.0
  %569 = vmatpush1.msra.mxu0 %v414
  %570 = vmatprep.subr.mxu0 0.0
  %571 = vmatpush1.msra.mxu0 %v415
  %572 = vmatprep.subr.mxu0 0.0
  %573 = vmatpush1.msra.mxu0 %v416
  %574 = vmatprep.subr.mxu0 0.0
  %575 = vmatpush1.msra.mxu0 %v417
  %576 = vmatprep.subr.mxu0 0.0
  %577 = vmatpush1.msra.mxu0 %v418
  %578 = vmatprep.subr.mxu0 0.0
  %579 = vmatpush1.msra.mxu0 %v419
  %580 = vmatprep.subr.mxu0 0.0
  %581 = vmatpush1.msra.mxu0 %v420
  %582 = vmatprep.subr.mxu0 0.0
  %583 = vmatpush1.msra.mxu0 %v421
  %584 = vmatprep.subr.mxu0 0.0
  %585 = vmatpush1.msra.mxu0 %v422
  %586 = vmatprep.subr.mxu0 0.0
  %587 = vmatpush1.msra.mxu0 %v423
  %588 = vmatprep.subr.mxu0 0.0
  %589 = vmatpush1.msra.mxu0 %v424
  %590 = vmatprep.subr.mxu0 0.0
  %591 = vmatpush1.msra.mxu0 %v425
  %592 = vmatprep.subr.mxu0 0.0
  %593 = vmatpush1.msra.mxu0 %v426
  %594 = vmatprep.subr.mxu0 0.0
  %595 = vmatpush1.msra.mxu0 %v427
  %596 = vmatprep.subr.mxu0 0.0
  %597 = vmatpush1.msra.mxu0 %v428
  %598 = vmatprep.subr.mxu0 0.0
  %599 = vmatpush1.msra.mxu0 %v429
  %600 = vmatprep.subr.mxu0 0.0
  %601 = vmatpush1.msra.mxu0 %v430
  %602 = vmatprep.subr.mxu0 0.0
  %603 = vmatpush1.msra.mxu0 %v431
  %604 = vmatprep.subr.mxu0 0.0
  %605 = vmatpush1.msra.mxu0 %v432
  %606 = vmatprep.subr.mxu0 0.0
  %607 = vmatpush1.msra.mxu0 %v433
  %608 = vmatprep.subr.mxu0 0.0
  %609 = vmatpush1.msra.mxu0 %v434
  %610 = vmatprep.subr.mxu0 0.0
  %611 = vmatpush1.msra.mxu0 %v435
  %612 = vmatprep.mubr.f32.mxu0 %v343
  %613 = vmatmul.mubr.f32.gmra.mrb[0].mxu0 %v342
  %v614 = vpop.f32.mrb[0].mxu0
  %v615 = vadd.f32 %v510, %v614
  %v616 = vpop.f32.mrb[0].mxu0
  %617 = vmatprep.mubr.f32.mxu0 %v347
  %618 = vmatmul.mubr.f32.gmra.mrb[0].mxu0 %v346
  %v619 = vpop.f32.mrb[0].mxu0
  %v620 = vadd.f32 %v515, %v619
  %v621 = vpop.f32.mrb[0].mxu0
  %622 = vmatprep.mubr.f32.mxu0 %v351
  %623 = vmatmul.mubr.f32.gmra.mrb[0].mxu0 %v350
  %v624 = vpop.f32.mrb[0].mxu0
  %v625 = vadd.f32 %v520, %v624
  %v626 = vpop.f32.mrb[0].mxu0
  %627 = vmatprep.mubr.f32.mxu0 %v355
  %628 = vmatmul.mubr.f32.gmra.mrb[0].mxu0 %v354
  %v629 = vpop.f32.mrb[0].mxu0
  %v630 = vadd.f32 %v525, %v629
  %v631 = vpop.f32.mrb[0].mxu0
  %632 = vmatprep.mubr.f32.mxu0 %v359
  %633 = vmatmul.mubr.f32.gmra.mrb[0].mxu0 %v358
  %v634 = vpop.f32.mrb[0].mxu0
  %v635 = vadd.f32 %v530, %v634
  %v636 = vpop.f32.mrb[0].mxu0
  %637 = vmatprep.mubr.f32.mxu0 %v363
  %638 = vmatmul.mubr.f32.gmra.mrb[0].mxu0 %v362
  %v639 = vpop.f32.mrb[0].mxu0
  %v640 = vadd.f32 %v535, %v639
  %v641 = vpop.f32.mrb[0].mxu0
  %642 = vmatprep.mubr.f32.mxu0 %v367
  %643 = vmatmul.mubr.f32.gmra.mrb[0].mxu0 %v366
  %v644 = vpop.f32.mrb[0].mxu0
  %v645 = vadd.f32 %v540, %v644
  %v646 = vpop.f32.mrb[0].mxu0
  %647 = vmatprep.mubr.f32.mxu0 %v371
  %648 = vmatmul.mubr.f32.gmra.mrb[0].mxu0 %v370
  %v649 = vpop.f32.mrb[0].mxu0
  %v650 = vadd.f32 %v545, %v649
  %v651 = vpop.f32.mrb[0].mxu0
  %652 = vdwg.mxu0
  %v653 = vxor.u32 %v615, 2147483648
  %v654 = vxor.u32 %v620, 2147483648
  %v655 = vxor.u32 %v625, 2147483648
  %v656 = vxor.u32 %v630, 2147483648
  %v657 = vxor.u32 %v635, 2147483648
  %v658 = vxor.u32 %v640, 2147483648
  %v659 = vxor.u32 %v645, 2147483648
  %v660 = vxor.u32 %v650, 2147483648
  %v661 = vmul.f32 %v653, 1.442695
  %v662 = vpow.pop %v661
  %v663 = vmul.f32 %v654, 1.442695
  %v664 = vpow.pop %v663
  %v665 = vmul.f32 %v655, 1.442695
  %v666 = vpow.pop %v665
  %v667 = vmul.f32 %v656, 1.442695
  %v668 = vpow.pop %v667
  %v669 = vmul.f32 %v657, 1.442695
  %v670 = vpow.pop %v669
  %v671 = vmul.f32 %v658, 1.442695
  %v672 = vpow.pop %v671
  %v673 = vmul.f32 %v659, 1.442695
  %v674 = vpow.pop %v673
  %v675 = vmul.f32 %v660, 1.442695
  %v676 = vpow.pop %v675
  %v677 = vadd.f32 %v662, 1.0
  %v678 = vadd.f32 %v664, 1.0
  %v679 = vadd.f32 %v666, 1.0
  %v680 = vadd.f32 %v668, 1.0
  %v681 = vadd.f32 %v670, 1.0
  %v682 = vadd.f32 %v672, 1.0
  %v683 = vadd.f32 %v674, 1.0
  %v684 = vadd.f32 %v676, 1.0
  %v685 = vrcp.pop %v677
  %v686 = vmul.f32 1.0, %v685
  %v687 = vrcp.pop %v678
  %v688 = vmul.f32 1.0, %v687
  %v689 = vrcp.pop %v679
  %v690 = vmul.f32 1.0, %v689
  %v691 = vrcp.pop %v680
  %v692 = vmul.f32 1.0, %v691
  %v693 = vrcp.pop %v681
  %v694 = vmul.f32 1.0, %v693
  %v695 = vrcp.pop %v682
  %v696 = vmul.f32 1.0, %v695
  %v697 = vrcp.pop %v683
  %v698 = vmul.f32 1.0, %v697
  %v699 = vrcp.pop %v684
  %v700 = vmul.f32 1.0, %v699
  %vm701 = vcmask 261120
  %702 = vst.msk [vmem:[%s5] sm:$0xff] %vm701, %v686
  %703 = vst.msk [vmem:[%s5 + $0x8] sm:$0xff] %vm701, %v688
  %704 = vst.msk [vmem:[%s5 + $0x10] sm:$0xff] %vm701, %v690
  %705 = vst.msk [vmem:[%s5 + $0x18] sm:$0xff] %vm701, %v692
  %706 = vst.msk [vmem:[%s5 + $0x20] sm:$0xff] %vm701, %v694
  %707 = vst.msk [vmem:[%s5 + $0x28] sm:$0xff] %vm701, %v696
  %708 = vst.msk [vmem:[%s5 + $0x30] sm:$0xff] %vm701, %v698
  %709 = vst.msk [vmem:[%s5 + $0x38] sm:$0xff] %vm701, %v700
  // Predicated region
  $region22: #{tpu_custom_call.1} parent=0 // pred_check
    _
  $region23: #{tpu_custom_call.1} parent=0 // pred_check_branch
    %711 = sbr.rel (0) target = $region25
  $region24: #{tpu_custom_call.1} parent=0 // pred_region
    _
  $region25: #{tpu_custom_call.1} parent=0 // pred_fallthru
    _
  // Predicated region
  $region26: #{tpu_custom_call.1} parent=0 // pred_check
    _
  $region27: #{tpu_custom_call.1} parent=0 // pred_check_branch
    %713 = sbr.rel (0) target = $region29
  $region28: #{tpu_custom_call.1} parent=0 // pred_region
    _
  $region29: #{tpu_custom_call.1} parent=0 // pred_fallthru
    _

</llo_original>
